<compile_context>
chip_gen: v7x
topology: tpu7x:2x2x1
jax: 0.10.0
libtpu: 0.0.40
codegen_flags: <defaults>
</compile_context>

<pallas_src>
import functools

import jax
import jax.numpy as jnp
from jax.experimental import pallas as pl
from jax.experimental.pallas import tpu as pltpu

BN_EPS = 1e-5


def bottleneck_kernel(x_ref, w1_ref, w2_ref, w3_ref, aw_ref, ac_ref,
                      gb12_ref, gb3_ref, o_ref, *, inv_count, H):
    """Fused Bottleneck forward on 'folded' (N*H, W*C) lane-dense tiles."""
    f32 = jnp.float32
    R = x_ref.shape[0]

    def bn(y, a_ref, gamma, beta, relu=True):
        # Training-mode BatchNorm, single pass:
        #   1) per-column sum / sum-of-squares via sublane (XLU) reduction,
        #   2) ONE tiny (2, L) x (L, L) MXU matmul spreads the column sums
        #      onto channel groups (columns w*C + c share channel c),
        #   3) biased variance + affine (+ ReLU) on the VPU.
        col_sum = jnp.sum(y, axis=0, keepdims=True)             # (1, L)
        col_sumsq = jnp.sum(y * y, axis=0, keepdims=True)       # (1, L)
        stats = jnp.concatenate([col_sum, col_sumsq], axis=0)   # (2, L)
        grp = jnp.dot(stats, a_ref[...], preferred_element_type=f32)
        mean = grp[0:1, :] * inv_count
        var = grp[1:2, :] * inv_count - mean * mean
        var = jnp.maximum(var, 0.0)        # cancellation guard for E[x^2]-E[x]^2
        scale = gamma * jax.lax.rsqrt(var + BN_EPS)
        out = (y - mean) * scale + beta
        if relu:
            out = jnp.maximum(out, 0.0)
        return out

    xf = x_ref[...]                                             # (R, W*Cin)
    gb12 = gb12_ref[...]                                        # (4, W*width)
    gb3 = gb3_ref[...]                                          # (2, W*Cout)

    # --- conv1 (1x1): single MXU matmul against kron(I_W, w1), + BN1 + ReLU
    y1 = jnp.dot(xf, w1_ref[...], preferred_element_type=f32)   # (R, W*width)
    y1 = bn(y1, aw_ref, gb12[0:1, :], gb12[1:2, :])

    # --- conv2 (3x3, stride 1, pad 1):
    # Vertical taps: XLU sublane rolls + iota masks (zero the rows whose
    # shifted source crosses an image/batch boundary -> vertical zero pad).
    # Horizontal taps + horizontal zero padding are folded into the single
    # block-tridiagonal (3*Lw, Lw) weight; one MXU contraction with K = 3*Lw.
    rows = jax.lax.broadcasted_iota(jnp.int32, y1.shape, 0)
    up = jnp.where((rows % H) != 0,
                   pltpu.roll(y1, shift=1, axis=0), 0.0)        # row h-1 (or 0)
    dn = jnp.where((rows % H) != H - 1,
                   pltpu.roll(y1, shift=R - 1, axis=0), 0.0)    # row h+1 (or 0)
    y2 = jnp.dot(jnp.concatenate([up, y1, dn], axis=1), w2_ref[...],
                 preferred_element_type=f32)                    # (R, W*width)
    y2 = bn(y2, aw_ref, gb12[2:3, :], gb12[3:4, :])

    # --- conv3 (1x1) + BN3 + residual add (downsample is None) + ReLU -------
    y3 = jnp.dot(y2, w3_ref[...], preferred_element_type=f32)   # (R, W*Cout)
    y3 = bn(y3, ac_ref, gb3[0:1, :], gb3[1:2, :], relu=False)
    o_ref[...] = jnp.maximum(y3 + xf, 0.0)                      # lane-dense store


def bottleneck_forward(x_nchw, params):
    """x_nchw: [N, Cin, H, W] float32 (PyTorch convention). Returns NCHW."""
    N, Cin, H, W = x_nchw.shape
    width = params["w1"].shape[0]          # OIHW
    Cout = params["w3"].shape[0]
    assert Cin == Cout, "downsample=None requires inplanes == planes * 4"

    R = N * H                  # folded rows
    Lin = W * Cin              # folded input lanes  (= 128 at the test shape)
    Lw = W * width             # folded mid lanes
    Lout = W * Cout            # folded output lanes (= 128 at the test shape)

    # ---------------- layout plumbing (plain JAX, outside the kernel) -------
    f32 = jnp.float32
    x_fold = jnp.transpose(x_nchw, (0, 2, 3, 1)).astype(f32)
    x_fold = x_fold.reshape(R, Lin)        # [n*H+h, w*Cin+c] = x[n,h,w,c]

    eye_w = jnp.eye(W, dtype=f32)
    w1m = params["w1"][:, :, 0, 0].T.astype(f32)             # (Cin, width)
    w3m = params["w3"][:, :, 0, 0].T.astype(f32)             # (width, Cout)
    w1b = jnp.kron(eye_w, w1m)                               # (W*Cin, W*width)
    w3b = jnp.kron(eye_w, w3m)                               # (W*width, W*Cout)

    # 3x3 weight -> single stacked block-tridiagonal (3*Lw, Lw) matrix; the
    # three vertical taps [kh=0 (up), kh=1 (center), kh=2 (down)] are stacked
    # along K; missing corner blocks implement the horizontal zero padding.
    w2t = jnp.transpose(params["w2"], (2, 3, 1, 0)).astype(f32)  # (kh,kw,ci,co)
    w2cat = jnp.concatenate([
        sum(jnp.kron(jnp.eye(W, k=-dw, dtype=f32), w2t[kh, dw + 1])
            for dw in (-1, 0, 1))
        for kh in range(3)], axis=0)                         # (3*Lw, Lw)

    # Channel group-spread matrices: A[w*C+c, w'*C+c'] = (c == c').
    a_w = jnp.kron(jnp.ones((W, W), f32), jnp.eye(width, dtype=f32))
    a_c = jnp.kron(jnp.ones((W, W), f32), jnp.eye(Cout, dtype=f32))

    # BN affine params tiled onto the folded columns, packed into 2 operands.
    gb12 = jnp.stack([jnp.tile(params["g1"], W), jnp.tile(params["b1"], W),
                      jnp.tile(params["g2"], W), jnp.tile(params["b2"], W)])
    gb3 = jnp.stack([jnp.tile(params["g3"], W), jnp.tile(params["b3"], W)])

    flops = (2 * R * (Lin * Lw + 3 * Lw * Lw + Lw * Lout)      # conv matmuls
             + 2 * 2 * (2 * Lw * Lw + Lout * Lout)             # BN stat spreads
             + 12 * R * (2 * Lw + Lout))                       # elementwise
    bytes_accessed = 4 * (x_fold.size + w1b.size + w2cat.size + w3b.size
                          + a_w.size + a_c.size + gb12.size + gb3.size
                          + R * Lout)

    vmem_spec = pl.BlockSpec(memory_space=pltpu.MemorySpace.VMEM)
    kernel = functools.partial(bottleneck_kernel,
                               inv_count=1.0 / (N * H * W), H=H)
    out_fold = pl.pallas_call(
        kernel,
        out_shape=jax.ShapeDtypeStruct((R, Lout), jnp.float32),
        in_specs=[vmem_spec] * 8,
        out_specs=vmem_spec,
        input_output_aliases={0: 0},   # output reuses the residual input buffer
        cost_estimate=pl.CostEstimate(flops=flops,
                                      transcendentals=2 * Lw + Lout,
                                      bytes_accessed=bytes_accessed),
    )(x_fold, w1b, w2cat, w3b, a_w, a_c, gb12, gb3)

    out_nhwc = out_fold.reshape(N, H, W, Cout)
    return jnp.transpose(out_nhwc, (0, 3, 1, 2))


# ---------------- deterministic parameter init (synthetic) ----------------
def init_params(key, inplanes, planes, base_width=2, groups=1):
    width = int(planes * (base_width / 2.0)) * groups
    cout = planes * 4  # expansion = 4
    ks = jax.random.split(key, 9)
    return dict(
        w1=0.1 * jax.random.normal(ks[0], (width, inplanes, 1, 1), jnp.float32),  # OIHW
        w2=0.1 * jax.random.normal(ks[1], (width, width, 3, 3), jnp.float32),
        w3=0.1 * jax.random.normal(ks[2], (cout, width, 1, 1), jnp.float32),
        g1=1.0 + 0.1 * jax.random.normal(ks[3], (width,), jnp.float32),
        b1=0.1 * jax.random.normal(ks[4], (width,), jnp.float32),
        g2=1.0 + 0.1 * jax.random.normal(ks[5], (width,), jnp.float32),
        b2=0.1 * jax.random.normal(ks[6], (width,), jnp.float32),
        g3=1.0 + 0.1 * jax.random.normal(ks[7], (cout,), jnp.float32),
        b3=0.1 * jax.random.normal(ks[8], (cout,), jnp.float32),
    )


# ---------------- plain-JAX reference (for correctness check) ----------------
def reference_forward(x, p):
    def conv(x, w, pad):
        return jax.lax.conv_general_dilated(
            x, w, window_strides=(1, 1), padding=[(pad, pad), (pad, pad)],
            dimension_numbers=("NCHW", "OIHW", "NCHW"))

    def bn(x, g, b):
        mean = x.mean(axis=(0, 2, 3), keepdims=True)
        var = ((x - mean) ** 2).mean(axis=(0, 2, 3), keepdims=True)
        xn = (x - mean) * jax.lax.rsqrt(var + BN_EPS)
        return xn * g.reshape(1, -1, 1, 1) + b.reshape(1, -1, 1, 1)

    identity = x
    out = jax.nn.relu(bn(conv(x, p["w1"], 0), p["g1"], p["b1"]))
    out = jax.nn.relu(bn(conv(out, p["w2"], 1), p["g2"], p["b2"]))
    out = bn(conv(out, p["w3"], 0), p["g3"], p["b3"])
    return jax.nn.relu(out + identity)


if __name__ == "__main__":
    key = jax.random.PRNGKey(0)
    k_x, k_p = jax.random.split(key)

    # Bottleneck(inplanes=16, planes=4, stride=1, downsample=None):
    #   width = 4, output channels = planes * 4 = 16 == inplanes -> residual OK
    N, Cin, H, W = 2, 16, 8, 8
    x = jax.random.normal(k_x, (N, Cin, H, W), jnp.float32)
    params = init_params(k_p, inplanes=Cin, planes=4)

    out = jax.block_until_ready(bottleneck_forward(x, params))
    ref = jax.block_until_ready(reference_forward(x, params))

    assert out.shape == (N, Cin, H, W)
    max_err = jnp.max(jnp.abs(out - ref))
    assert jnp.allclose(out, ref, rtol=1e-3, atol=1e-3), f"max abs err {max_err}"

    print("KERNEL_OK")
</pallas_src>

<mosaic_0001>
module attributes {stable_mosaic.version = 11 : i64} {
  func.func @bottleneck_kernel(%arg0: memref<16x128xf32, #tpu.memory_space<vmem>>, %arg1: memref<128x32xf32, #tpu.memory_space<vmem>>, %arg2: memref<96x32xf32, #tpu.memory_space<vmem>>, %arg3: memref<32x128xf32, #tpu.memory_space<vmem>>, %arg4: memref<32x32xf32, #tpu.memory_space<vmem>>, %arg5: memref<128x128xf32, #tpu.memory_space<vmem>>, %arg6: memref<4x32xf32, #tpu.memory_space<vmem>>, %arg7: memref<2x128xf32, #tpu.memory_space<vmem>>, %arg8: memref<16x128xf32, #tpu.memory_space<vmem>>) attributes {dimension_semantics = [], scalar_prefetch = 0 : i64, scratch_operands = 0 : i64, tpu.core_type = #tpu.core_type<tc>} {
    %c0 = arith.constant 0 : index
    %c0_0 = arith.constant 0 : index
    %0 = vector.load %arg0[%c0, %c0_0] : memref<16x128xf32, #tpu.memory_space<vmem>>, vector<16x128xf32>
    %c0_1 = arith.constant 0 : index
    %c0_2 = arith.constant 0 : index
    %1 = vector.load %arg6[%c0_1, %c0_2] : memref<4x32xf32, #tpu.memory_space<vmem>>, vector<4x32xf32>
    %c0_3 = arith.constant 0 : index
    %c0_4 = arith.constant 0 : index
    %2 = vector.load %arg7[%c0_3, %c0_4] : memref<2x128xf32, #tpu.memory_space<vmem>>, vector<2x128xf32>
    %c0_5 = arith.constant 0 : index
    %c0_6 = arith.constant 0 : index
    %3 = vector.load %arg1[%c0_5, %c0_6] : memref<128x32xf32, #tpu.memory_space<vmem>>, vector<128x32xf32>
    %cst = arith.constant dense<0.000000e+00> : vector<16x32xf32>
    %4 = tpu.matmul %0, %3, %cst {dimension_numbers = #tpu.dot_dimension_numbers<[1], [0], [0], [1], [0, 0, 1, 1], [], []>} : vector<16x128xf32>, vector<128x32xf32>, vector<16x32xf32> -> vector<16x32xf32>
    %5 = vector.extract_strided_slice %1 {offsets = [0, 0], sizes = [1, 32], strides = [1, 1]} : vector<4x32xf32> to vector<1x32xf32>
    %6 = vector.extract_strided_slice %1 {offsets = [1, 0], sizes = [1, 32], strides = [1, 1]} : vector<4x32xf32> to vector<1x32xf32>
    %cst_7 = arith.constant dense<0.000000e+00> : vector<32xf32>
    %7 = vector.multi_reduction <add>, %4, %cst_7 [0] : vector<16x32xf32> to vector<32xf32>
    %8 = vector.shape_cast %7 : vector<32xf32> to vector<1x32xf32>
    %9 = arith.mulf %4, %4 : vector<16x32xf32>
    %cst_8 = arith.constant dense<0.000000e+00> : vector<32xf32>
    %10 = vector.multi_reduction <add>, %9, %cst_8 [0] : vector<16x32xf32> to vector<32xf32>
    %11 = vector.shape_cast %10 : vector<32xf32> to vector<1x32xf32>
    %12 = tpu.concatenate %8, %11 in 0 : vector<1x32xf32>, vector<1x32xf32> -> vector<2x32xf32>
    %c0_9 = arith.constant 0 : index
    %c0_10 = arith.constant 0 : index
    %13 = vector.load %arg4[%c0_9, %c0_10] : memref<32x32xf32, #tpu.memory_space<vmem>>, vector<32x32xf32>
    %cst_11 = arith.constant dense<0.000000e+00> : vector<2x32xf32>
    %14 = tpu.matmul %12, %13, %cst_11 {dimension_numbers = #tpu.dot_dimension_numbers<[1], [0], [0], [1], [0, 0, 1, 1], [], []>} : vector<2x32xf32>, vector<32x32xf32>, vector<2x32xf32> -> vector<2x32xf32>
    %15 = vector.extract_strided_slice %14 {offsets = [0, 0], sizes = [1, 32], strides = [1, 1]} : vector<2x32xf32> to vector<1x32xf32>
    %cst_12 = arith.constant 7.812500e-03 : f32
    %16 = vector.broadcast %cst_12 : f32 to vector<1x32xf32>
    %17 = arith.mulf %15, %16 : vector<1x32xf32>
    %18 = vector.extract_strided_slice %14 {offsets = [1, 0], sizes = [1, 32], strides = [1, 1]} : vector<2x32xf32> to vector<1x32xf32>
    %cst_13 = arith.constant 7.812500e-03 : f32
    %19 = vector.broadcast %cst_13 : f32 to vector<1x32xf32>
    %20 = arith.mulf %18, %19 : vector<1x32xf32>
    %21 = arith.mulf %17, %17 : vector<1x32xf32>
    %22 = arith.subf %20, %21 : vector<1x32xf32>
    %cst_14 = arith.constant 0.000000e+00 : f32
    %23 = vector.broadcast %cst_14 : f32 to vector<1x32xf32>
    %24 = arith.maximumf %22, %23 : vector<1x32xf32>
    %cst_15 = arith.constant 9.99999974E-6 : f32
    %25 = vector.broadcast %cst_15 : f32 to vector<1x32xf32>
    %26 = arith.addf %24, %25 : vector<1x32xf32>
    %27 = math.rsqrt %26 : vector<1x32xf32>
    %28 = arith.mulf %5, %27 : vector<1x32xf32>
    %29 = vector.broadcast %17 : vector<1x32xf32> to vector<16x32xf32>
    %30 = arith.subf %4, %29 : vector<16x32xf32>
    %31 = vector.broadcast %28 : vector<1x32xf32> to vector<16x32xf32>
    %32 = arith.mulf %30, %31 : vector<16x32xf32>
    %33 = vector.broadcast %6 : vector<1x32xf32> to vector<16x32xf32>
    %34 = arith.addf %32, %33 : vector<16x32xf32>
    %cst_16 = arith.constant 0.000000e+00 : f32
    %35 = vector.broadcast %cst_16 : f32 to vector<16x32xf32>
    %36 = arith.maximumf %34, %35 : vector<16x32xf32>
    %37 = tpu.iota {dimensions = array<i32: 0>} : vector<16x32xi32>
    %c8_i32 = arith.constant 8 : i32
    %c0_i32 = arith.constant 0 : i32
    %38 = arith.cmpi eq, %c8_i32, %c0_i32 : i32
    %c1_i32 = arith.constant 1 : i32
    %39 = arith.select %38, %c1_i32, %c8_i32 : i32
    %40 = vector.broadcast %39 : i32 to vector<16x32xi32>
    %41 = arith.remsi %37, %40 : vector<16x32xi32>
    %c0_i32_17 = arith.constant 0 : i32
    %42 = vector.broadcast %c0_i32_17 : i32 to vector<16x32xi32>
    %43 = arith.cmpi ne, %41, %42 : vector<16x32xi32>
    %c0_i32_18 = arith.constant 0 : i32
    %44 = vector.broadcast %c0_i32_18 : i32 to vector<16x32xi32>
    %45 = arith.cmpi slt, %41, %44 : vector<16x32xi32>
    %c0_i32_19 = arith.constant 0 : i32
    %46 = arith.cmpi slt, %39, %c0_i32_19 : i32
    %47 = vector.broadcast %46 : i1 to vector<16x32xi1>
    %48 = vector.broadcast %47 : vector<16x32xi1> to vector<16x32xi1>
    %49 = arith.xori %45, %48 : vector<16x32xi1>
    %50 = arith.andi %49, %43 : vector<16x32xi1>
    %51 = vector.broadcast %39 : i32 to vector<16x32xi32>
    %52 = arith.addi %41, %51 : vector<16x32xi32>
    %53 = arith.select %50, %52, %41 : vector<16x32xi1>, vector<16x32xi32>
    %c0_i32_20 = arith.constant 0 : i32
    %54 = vector.broadcast %c0_i32_20 : i32 to vector<16x32xi32>
    %55 = arith.cmpi ne, %53, %54 : vector<16x32xi32>
    %c1_i32_21 = arith.constant 1 : i32
    %56 = tpu.dynamic_rotate %36 by %c1_i32_21 dim 0 : vector<16x32xf32>, i32 -> vector<16x32xf32>
    %cst_22 = arith.constant 0.000000e+00 : f32
    %57 = vector.broadcast %cst_22 : f32 to vector<16x32xf32>
    %58 = arith.select %55, %56, %57 : vector<16x32xi1>, vector<16x32xf32>
    %c8_i32_23 = arith.constant 8 : i32
    %c0_i32_24 = arith.constant 0 : i32
    %59 = arith.cmpi eq, %c8_i32_23, %c0_i32_24 : i32
    %c1_i32_25 = arith.constant 1 : i32
    %60 = arith.select %59, %c1_i32_25, %c8_i32_23 : i32
    %61 = vector.broadcast %60 : i32 to vector<16x32xi32>
    %62 = arith.remsi %37, %61 : vector<16x32xi32>
    %c0_i32_26 = arith.constant 0 : i32
    %63 = vector.broadcast %c0_i32_26 : i32 to vector<16x32xi32>
    %64 = arith.cmpi ne, %62, %63 : vector<16x32xi32>
    %c0_i32_27 = arith.constant 0 : i32
    %65 = vector.broadcast %c0_i32_27 : i32 to vector<16x32xi32>
    %66 = arith.cmpi slt, %62, %65 : vector<16x32xi32>
    %c0_i32_28 = arith.constant 0 : i32
    %67 = arith.cmpi slt, %60, %c0_i32_28 : i32
    %68 = vector.broadcast %67 : i1 to vector<16x32xi1>
    %69 = vector.broadcast %68 : vector<16x32xi1> to vector<16x32xi1>
    %70 = arith.xori %66, %69 : vector<16x32xi1>
    %71 = arith.andi %70, %64 : vector<16x32xi1>
    %72 = vector.broadcast %60 : i32 to vector<16x32xi32>
    %73 = arith.addi %62, %72 : vector<16x32xi32>
    %74 = arith.select %71, %73, %62 : vector<16x32xi1>, vector<16x32xi32>
    %c7_i32 = arith.constant 7 : i32
    %75 = vector.broadcast %c7_i32 : i32 to vector<16x32xi32>
    %76 = arith.cmpi ne, %74, %75 : vector<16x32xi32>
    %c15_i32 = arith.constant 15 : i32
    %77 = tpu.dynamic_rotate %36 by %c15_i32 dim 0 : vector<16x32xf32>, i32 -> vector<16x32xf32>
    %cst_29 = arith.constant 0.000000e+00 : f32
    %78 = vector.broadcast %cst_29 : f32 to vector<16x32xf32>
    %79 = arith.select %76, %77, %78 : vector<16x32xi1>, vector<16x32xf32>
    %80 = tpu.concatenate %58, %36, %79 in 1 : vector<16x32xf32>, vector<16x32xf32>, vector<16x32xf32> -> vector<16x96xf32>
    %c0_30 = arith.constant 0 : index
    %c0_31 = arith.constant 0 : index
    %81 = vector.load %arg2[%c0_30, %c0_31] : memref<96x32xf32, #tpu.memory_space<vmem>>, vector<96x32xf32>
    %cst_32 = arith.constant dense<0.000000e+00> : vector<16x32xf32>
    %82 = tpu.matmul %80, %81, %cst_32 {dimension_numbers = #tpu.dot_dimension_numbers<[1], [0], [0], [1], [0, 0, 1, 1], [], []>} : vector<16x96xf32>, vector<96x32xf32>, vector<16x32xf32> -> vector<16x32xf32>
    %83 = vector.extract_strided_slice %1 {offsets = [2, 0], sizes = [1, 32], strides = [1, 1]} : vector<4x32xf32> to vector<1x32xf32>
    %84 = vector.extract_strided_slice %1 {offsets = [3, 0], sizes = [1, 32], strides = [1, 1]} : vector<4x32xf32> to vector<1x32xf32>
    %cst_33 = arith.constant dense<0.000000e+00> : vector<32xf32>
    %85 = vector.multi_reduction <add>, %82, %cst_33 [0] : vector<16x32xf32> to vector<32xf32>
    %86 = vector.shape_cast %85 : vector<32xf32> to vector<1x32xf32>
    %87 = arith.mulf %82, %82 : vector<16x32xf32>
    %cst_34 = arith.constant dense<0.000000e+00> : vector<32xf32>
    %88 = vector.multi_reduction <add>, %87, %cst_34 [0] : vector<16x32xf32> to vector<32xf32>
    %89 = vector.shape_cast %88 : vector<32xf32> to vector<1x32xf32>
    %90 = tpu.concatenate %86, %89 in 0 : vector<1x32xf32>, vector<1x32xf32> -> vector<2x32xf32>
    %c0_35 = arith.constant 0 : index
    %c0_36 = arith.constant 0 : index
    %91 = vector.load %arg4[%c0_35, %c0_36] : memref<32x32xf32, #tpu.memory_space<vmem>>, vector<32x32xf32>
    %cst_37 = arith.constant dense<0.000000e+00> : vector<2x32xf32>
    %92 = tpu.matmul %90, %91, %cst_37 {dimension_numbers = #tpu.dot_dimension_numbers<[1], [0], [0], [1], [0, 0, 1, 1], [], []>} : vector<2x32xf32>, vector<32x32xf32>, vector<2x32xf32> -> vector<2x32xf32>
    %93 = vector.extract_strided_slice %92 {offsets = [0, 0], sizes = [1, 32], strides = [1, 1]} : vector<2x32xf32> to vector<1x32xf32>
    %cst_38 = arith.constant 7.812500e-03 : f32
    %94 = vector.broadcast %cst_38 : f32 to vector<1x32xf32>
    %95 = arith.mulf %93, %94 : vector<1x32xf32>
    %96 = vector.extract_strided_slice %92 {offsets = [1, 0], sizes = [1, 32], strides = [1, 1]} : vector<2x32xf32> to vector<1x32xf32>
    %cst_39 = arith.constant 7.812500e-03 : f32
    %97 = vector.broadcast %cst_39 : f32 to vector<1x32xf32>
    %98 = arith.mulf %96, %97 : vector<1x32xf32>
    %99 = arith.mulf %95, %95 : vector<1x32xf32>
    %100 = arith.subf %98, %99 : vector<1x32xf32>
    %cst_40 = arith.constant 0.000000e+00 : f32
    %101 = vector.broadcast %cst_40 : f32 to vector<1x32xf32>
    %102 = arith.maximumf %100, %101 : vector<1x32xf32>
    %cst_41 = arith.constant 9.99999974E-6 : f32
    %103 = vector.broadcast %cst_41 : f32 to vector<1x32xf32>
    %104 = arith.addf %102, %103 : vector<1x32xf32>
    %105 = math.rsqrt %104 : vector<1x32xf32>
    %106 = arith.mulf %83, %105 : vector<1x32xf32>
    %107 = vector.broadcast %95 : vector<1x32xf32> to vector<16x32xf32>
    %108 = arith.subf %82, %107 : vector<16x32xf32>
    %109 = vector.broadcast %106 : vector<1x32xf32> to vector<16x32xf32>
    %110 = arith.mulf %108, %109 : vector<16x32xf32>
    %111 = vector.broadcast %84 : vector<1x32xf32> to vector<16x32xf32>
    %112 = arith.addf %110, %111 : vector<16x32xf32>
    %cst_42 = arith.constant 0.000000e+00 : f32
    %113 = vector.broadcast %cst_42 : f32 to vector<16x32xf32>
    %114 = arith.maximumf %112, %113 : vector<16x32xf32>
    %c0_43 = arith.constant 0 : index
    %c0_44 = arith.constant 0 : index
    %115 = vector.load %arg3[%c0_43, %c0_44] : memref<32x128xf32, #tpu.memory_space<vmem>>, vector<32x128xf32>
    %cst_45 = arith.constant dense<0.000000e+00> : vector<16x128xf32>
    %116 = tpu.matmul %114, %115, %cst_45 {dimension_numbers = #tpu.dot_dimension_numbers<[1], [0], [0], [1], [0, 0, 1, 1], [], []>} : vector<16x32xf32>, vector<32x128xf32>, vector<16x128xf32> -> vector<16x128xf32>
    %117 = vector.extract_strided_slice %2 {offsets = [0, 0], sizes = [1, 128], strides = [1, 1]} : vector<2x128xf32> to vector<1x128xf32>
    %118 = vector.extract_strided_slice %2 {offsets = [1, 0], sizes = [1, 128], strides = [1, 1]} : vector<2x128xf32> to vector<1x128xf32>
    %cst_46 = arith.constant dense<0.000000e+00> : vector<128xf32>
    %119 = vector.multi_reduction <add>, %116, %cst_46 [0] : vector<16x128xf32> to vector<128xf32>
    %120 = vector.shape_cast %119 : vector<128xf32> to vector<1x128xf32>
    %121 = arith.mulf %116, %116 : vector<16x128xf32>
    %cst_47 = arith.constant dense<0.000000e+00> : vector<128xf32>
    %122 = vector.multi_reduction <add>, %121, %cst_47 [0] : vector<16x128xf32> to vector<128xf32>
    %123 = vector.shape_cast %122 : vector<128xf32> to vector<1x128xf32>
    %124 = tpu.concatenate %120, %123 in 0 : vector<1x128xf32>, vector<1x128xf32> -> vector<2x128xf32>
    %c0_48 = arith.constant 0 : index
    %c0_49 = arith.constant 0 : index
    %125 = vector.load %arg5[%c0_48, %c0_49] : memref<128x128xf32, #tpu.memory_space<vmem>>, vector<128x128xf32>
    %cst_50 = arith.constant dense<0.000000e+00> : vector<2x128xf32>
    %126 = tpu.matmul %124, %125, %cst_50 {dimension_numbers = #tpu.dot_dimension_numbers<[1], [0], [0], [1], [0, 0, 1, 1], [], []>} : vector<2x128xf32>, vector<128x128xf32>, vector<2x128xf32> -> vector<2x128xf32>
    %127 = vector.extract_strided_slice %126 {offsets = [0, 0], sizes = [1, 128], strides = [1, 1]} : vector<2x128xf32> to vector<1x128xf32>
    %cst_51 = arith.constant 7.812500e-03 : f32
    %128 = vector.broadcast %cst_51 : f32 to vector<1x128xf32>
    %129 = arith.mulf %127, %128 : vector<1x128xf32>
    %130 = vector.extract_strided_slice %126 {offsets = [1, 0], sizes = [1, 128], strides = [1, 1]} : vector<2x128xf32> to vector<1x128xf32>
    %cst_52 = arith.constant 7.812500e-03 : f32
    %131 = vector.broadcast %cst_52 : f32 to vector<1x128xf32>
    %132 = arith.mulf %130, %131 : vector<1x128xf32>
    %133 = arith.mulf %129, %129 : vector<1x128xf32>
    %134 = arith.subf %132, %133 : vector<1x128xf32>
    %cst_53 = arith.constant 0.000000e+00 : f32
    %135 = vector.broadcast %cst_53 : f32 to vector<1x128xf32>
    %136 = arith.maximumf %134, %135 : vector<1x128xf32>
    %cst_54 = arith.constant 9.99999974E-6 : f32
    %137 = vector.broadcast %cst_54 : f32 to vector<1x128xf32>
    %138 = arith.addf %136, %137 : vector<1x128xf32>
    %139 = math.rsqrt %138 : vector<1x128xf32>
    %140 = arith.mulf %117, %139 : vector<1x128xf32>
    %141 = vector.broadcast %129 : vector<1x128xf32> to vector<16x128xf32>
    %142 = arith.subf %116, %141 : vector<16x128xf32>
    %143 = vector.broadcast %140 : vector<1x128xf32> to vector<16x128xf32>
    %144 = arith.mulf %142, %143 : vector<16x128xf32>
    %145 = vector.broadcast %118 : vector<1x128xf32> to vector<16x128xf32>
    %146 = arith.addf %144, %145 : vector<16x128xf32>
    %147 = arith.addf %146, %0 : vector<16x128xf32>
    %cst_55 = arith.constant 0.000000e+00 : f32
    %148 = vector.broadcast %cst_55 : f32 to vector<16x128xf32>
    %149 = arith.maximumf %147, %148 : vector<16x128xf32>
    %c0_56 = arith.constant 0 : index
    %c0_57 = arith.constant 0 : index
    %150 = vector.load %arg8[%c0_56, %c0_57] : memref<16x128xf32, #tpu.memory_space<vmem>>, vector<16x128xf32>
    tpu.vector_store %arg8[%c0_56, %c0_57], %149 {strides = array<i32>} : memref<16x128xf32, #tpu.memory_space<vmem>>, vector<16x128xf32>,
    return
  }
}

</mosaic_0001>

<llo_original>
// kernel: tpu_custom_call.1
$region0: #{tpu_custom_call.1}
  #allocation0 [shape = 'u32[]', space=smem, size = 0x4, offset = 0x4, fixed_abs, tag = 'smem constant byte address 0x4 - core index']
  #allocation1 [shape = 'u32[144,128]{1,0:T(1,128)}', space=vmem, size = 0x12000, scoped, tag = 'internal scratch']
  %s0 = inlined_call_operand.hbm [shape: f32[16,128], index: 0, kind: input, shape index: {}, may-alias: {0,8}]
  %s1 = inlined_call_operand.vmem [shape: f32[128,32], index: 1, kind: input, shape index: {}]
  %s2 = inlined_call_operand.vmem [shape: f32[96,32], index: 2, kind: input, shape index: {}]
  %s3 = inlined_call_operand.vmem [shape: f32[32,128], index: 3, kind: input, shape index: {}]
  %s4 = inlined_call_operand.vmem [shape: f32[32,32], index: 4, kind: input, shape index: {}]
  %s5 = inlined_call_operand.vmem [shape: f32[128,128], index: 5, kind: input, shape index: {}]
  %s6 = inlined_call_operand.vmem [shape: f32[4,32], index: 6, kind: input, shape index: {}]
  %s7 = inlined_call_operand.vmem [shape: f32[2,128], index: 7, kind: input, shape index: {}]
  %s8 = inlined_call_operand.hbm [shape: f32[16,128], index: 8, kind: output, shape index: {}, may-alias: {0,8}]
  %s9 = sld [smem:[#allocation0]]
  $region46: #{tpu_custom_call.1} parent=0
    _
  %s11 = ssub.s32 1, %s9
  %s12 = scalar_select 0, %s11, %s9
  $region1: #{tpu_custom_call.1} parent=0
    #allocation2 [shape = 'u8[8192]{0}', space=vmem, size = 0x2000, scoped, tag = 'input window, operand 0, single buffered']
    #allocation3 [shape = 's32[1]{0}', space=sflag, size = 0x4, scoped, tag = 'scoped memory for tpu_custom_call.1']
    #allocation4 [shape = 's32[1]{0}', space=sflag, size = 0x4, scoped, tag = 'scoped memory for tpu_custom_call.1']
    #allocation5 [shape = 'u8[8192]{0}', space=vmem, size = 0x2000, scoped, tag = 'output window, operand 0, single buffered']
    %13 = vsyncpa [#allocation3], 0
    %14 = vsyncpa [#allocation4], 0
    // Predicated region
    $region2: #{tpu_custom_call.1} parent=1 // pred_check
      _
    $region3: #{tpu_custom_call.1} parent=1 // pred_check_branch
      %16 = sbr.rel (0) target = $region5
    $region4: #{tpu_custom_call.1} parent=1 // pred_region
      %s18 = ssub.s32 256, 256
      %19 = vsyncadd [#allocation3], %s18
      %s20 = sshll.u32 [#allocation2], 4
      %s21 = int_to_ptr.vmem [resolvable:$true] %s20
      %26 = dma.hbm_to_vmem [thread:$0]  %s0, 256, %s21, [#allocation3], 128, 128, 8
    $region5: #{tpu_custom_call.1} parent=1 // pred_fallthru
      _
    // Predicated region
    $region6: #{tpu_custom_call.1} parent=1 // pred_check
      _
    $region7: #{tpu_custom_call.1} parent=1 // pred_check_branch
      %28 = sbr.rel (0) target = $region9
    $region8: #{tpu_custom_call.1} parent=1 // pred_region
      _
    $region9: #{tpu_custom_call.1} parent=1 // pred_fallthru
      _
    // Predicated region
    $region10: #{tpu_custom_call.1} parent=1 // pred_check
      _
    $region11: #{tpu_custom_call.1} parent=1 // pred_check_branch
      %30 = sbr.rel (0) target = $region13
    $region12: #{tpu_custom_call.1} parent=1 // pred_region
      _
    $region13: #{tpu_custom_call.1} parent=1 // pred_fallthru
      _
    // Predicated region
    $region14: #{tpu_custom_call.1} parent=1 // pred_check
      _
    $region15: #{tpu_custom_call.1} parent=1 // pred_check_branch
      %32 = sbr.rel (0) target = $region17
    $region16: #{tpu_custom_call.1} parent=1 // pred_region
      _
    $region17: #{tpu_custom_call.1} parent=1 // pred_fallthru
      _
    // Predicated region
    $region18: #{tpu_custom_call.1} parent=1 // pred_check
      _
    $region19: #{tpu_custom_call.1} parent=1 // pred_check_branch
      %34 = sbr.rel (0) target = $region21
    $region20: #{tpu_custom_call.1} parent=1 // pred_region
      _
    $region21: #{tpu_custom_call.1} parent=1 // pred_fallthru
      _
    // Predicated region
    $region22: #{tpu_custom_call.1} parent=1 // pred_check
      _
    $region23: #{tpu_custom_call.1} parent=1 // pred_check_branch
      %36 = sbr.rel (0) target = $region25
    $region24: #{tpu_custom_call.1} parent=1 // pred_region
      _
    $region25: #{tpu_custom_call.1} parent=1 // pred_fallthru
      _
    // Predicated region
    $region26: #{tpu_custom_call.1} parent=1 // pred_check
      _
    $region27: #{tpu_custom_call.1} parent=1 // pred_check_branch
      %38 = sbr.rel (0) target = $region29
    $region28: #{tpu_custom_call.1} parent=1 // pred_region
      _
    $region29: #{tpu_custom_call.1} parent=1 // pred_fallthru
      _
    // Predicated region
    $region30: #{tpu_custom_call.1} parent=1 // pred_check
      _
    $region31: #{tpu_custom_call.1} parent=1 // pred_check_branch
      %40 = sbr.rel (0) target = $region33
    $region32: #{tpu_custom_call.1} parent=1 // pred_region
      _
    $region33: #{tpu_custom_call.1} parent=1 // pred_fallthru
      _
    // Predicated region
    $region34: #{tpu_custom_call.1} parent=1 // pred_check
      _
    $region35: #{tpu_custom_call.1} parent=1 // pred_check_branch
      %42 = sbr.rel (0) target = $region37
    $region36: #{tpu_custom_call.1} parent=1 // pred_region
      %43 = dma.done [#allocation3], 256
    $region37: #{tpu_custom_call.1} parent=1 // pred_fallthru
      _
    %v44 = vld [vmem:[#allocation2] sm:$0xff]
    %v45 = vld [vmem:[#allocation2 + $0x8] sm:$0xff]
    %v46 = vld [vmem:[%s6] sm:$0xf]
    %v47 = vld [vmem:[%s7] sm:$0x3]
    %v48 = vld [vmem:[%s1] sm:$0xff]
    %v49 = vld [vmem:[%s1 + $0x8] sm:$0xff]
    %v50 = vld [vmem:[%s1 + $0x10] sm:$0xff]
    %v51 = vld [vmem:[%s1 + $0x18] sm:$0xff]
    %v52 = vld [vmem:[%s1 + $0x20] sm:$0xff]
    %v53 = vld [vmem:[%s1 + $0x28] sm:$0xff]
    %v54 = vld [vmem:[%s1 + $0x30] sm:$0xff]
    %v55 = vld [vmem:[%s1 + $0x38] sm:$0xff]
    %v56 = vld [vmem:[%s1 + $0x40] sm:$0xff]
    %v57 = vld [vmem:[%s1 + $0x48] sm:$0xff]
    %v58 = vld [vmem:[%s1 + $0x50] sm:$0xff]
    %v59 = vld [vmem:[%s1 + $0x58] sm:$0xff]
    %v60 = vld [vmem:[%s1 + $0x60] sm:$0xff]
    %v61 = vld [vmem:[%s1 + $0x68] sm:$0xff]
    %v62 = vld [vmem:[%s1 + $0x70] sm:$0xff]
    %v63 = vld [vmem:[%s1 + $0x78] sm:$0xff]
    %64 = vmatprep.subr.mxu0 0.0
    %65 = vmatpush1.msra.mxu0 %v48
    %66 = vmatprep.subr.mxu0 0.0
    %67 = vmatpush1.msra.mxu0 %v49
    %68 = vmatprep.subr.mxu0 0.0
    %69 = vmatpush1.msra.mxu0 %v50
    %70 = vmatprep.subr.mxu0 0.0
    %71 = vmatpush1.msra.mxu0 %v51
    %72 = vmatprep.subr.mxu0 0.0
    %73 = vmatpush1.msra.mxu0 %v52
    %74 = vmatprep.subr.mxu0 0.0
    %75 = vmatpush1.msra.mxu0 %v53
    %76 = vmatprep.subr.mxu0 0.0
    %77 = vmatpush1.msra.mxu0 %v54
    %78 = vmatprep.subr.mxu0 0.0
    %79 = vmatpush1.msra.mxu0 %v55
    %80 = vmatprep.subr.mxu0 0.0
    %81 = vmatpush1.msra.mxu0 %v56
    %82 = vmatprep.subr.mxu0 0.0
    %83 = vmatpush1.msra.mxu0 %v57
    %84 = vmatprep.subr.mxu0 0.0
    %85 = vmatpush1.msra.mxu0 %v58
    %86 = vmatprep.subr.mxu0 0.0
    %87 = vmatpush1.msra.mxu0 %v59
    %88 = vmatprep.subr.mxu0 0.0
    %89 = vmatpush1.msra.mxu0 %v60
    %90 = vmatprep.subr.mxu0 0.0
    %91 = vmatpush1.msra.mxu0 %v61
    %92 = vmatprep.subr.mxu0 0.0
    %93 = vmatpush1.msra.mxu0 %v62
    %94 = vmatprep.subr.mxu0 0.0
    %95 = vmatpush1.msra.mxu0 %v63
    %96 = vmatprep.subr.mxu0 0.0
    %97 = vmatpush1.msra.mxu0 0.0
    %98 = vmatprep.subr.mxu0 0.0
    %99 = vmatpush1.msra.mxu0 0.0
    %100 = vmatprep.subr.mxu0 0.0
    %101 = vmatpush1.msra.mxu0 0.0
    %102 = vmatprep.subr.mxu0 0.0
    %103 = vmatpush1.msra.mxu0 0.0
    %104 = vmatprep.subr.mxu0 0.0
    %105 = vmatpush1.msra.mxu0 0.0
    %106 = vmatprep.subr.mxu0 0.0
    %107 = vmatpush1.msra.mxu0 0.0
    %108 = vmatprep.subr.mxu0 0.0
    %109 = vmatpush1.msra.mxu0 0.0
    %110 = vmatprep.subr.mxu0 0.0
    %111 = vmatpush1.msra.mxu0 0.0
    %112 = vmatprep.subr.mxu0 0.0
    %113 = vmatpush1.msra.mxu0 0.0
    %114 = vmatprep.subr.mxu0 0.0
    %115 = vmatpush1.msra.mxu0 0.0
    %116 = vmatprep.subr.mxu0 0.0
    %117 = vmatpush1.msra.mxu0 0.0
    %118 = vmatprep.subr.mxu0 0.0
    %119 = vmatpush1.msra.mxu0 0.0
    %120 = vmatprep.subr.mxu0 0.0
    %121 = vmatpush1.msra.mxu0 0.0
    %122 = vmatprep.subr.mxu0 0.0
    %123 = vmatpush1.msra.mxu0 0.0
    %124 = vmatprep.subr.mxu0 0.0
    %125 = vmatpush1.msra.mxu0 0.0
    %126 = vmatprep.subr.mxu0 0.0
    %127 = vmatpush1.msra.mxu0 0.0
    %128 = vmatprep.mubr.f32.mxu0 0.0
    %129 = vmatmul.mubr.f32.gmra.mrb[0].mxu0 %v44
    %v130 = vpop.f32.mrb[0].mxu0
    %v131 = vadd.f32 0.0, %v130
    %v132 = vpop.f32.mrb[0].mxu0
    %133 = vmatprep.mubr.f32.mxu0 0.0
    %134 = vmatmul.mubr.f32.gmra.mrb[0].mxu0 %v45
    %v135 = vpop.f32.mrb[0].mxu0
    %v136 = vadd.f32 0.0, %v135
    %v137 = vpop.f32.mrb[0].mxu0
    %138 = vdwg.mxu0
    %vm139 = vcmask 261120
    %v140 = vsel %vm139, %v131, 0.0
    %v141 = vsel %vm139, %v136, 0.0
    %v142 = vadd.f32 %v140, %v141
    %v143 = vrot.slane %v142, 4
    %v144 = vadd.f32 %v142, %v143
    %v145 = vrot.slane %v144, 2
    %v146 = vadd.f32 %v144, %v145
    %v147 = vrot.slane %v146, 1
    %v148 = vadd.f32 %v146, %v147
    %v149 = vmul.f32 %v131, %v131
    %v150 = vmul.f32 %v136, %v136
    %v151 = vsel %vm139, %v149, 0.0
    %v152 = vsel %vm139, %v150, 0.0
    %v153 = vadd.f32 %v151, %v152
    %v154 = vrot.slane %v153, 4
    %v155 = vadd.f32 %v153, %v154
    %v156 = vrot.slane %v155, 2
    %v157 = vadd.f32 %v155, %v156
    %v158 = vrot.slane %v157, 1
    %v159 = vadd.f32 %v157, %v158
    %vm160 = vcmask 1040384
    %v161 = vsel %vm160, %v148, %v159
    %v162 = vld [vmem:[%s4] sm:$0xff]
    %v163 = vld [vmem:[%s4 + $0x8] sm:$0xff]
    %v164 = vld [vmem:[%s4 + $0x10] sm:$0xff]
    %v165 = vld [vmem:[%s4 + $0x18] sm:$0xff]
    %v167 = vsel %vm139, %v161, 0
    %169 = vmatprep.subr.mxu0 0.0
    %170 = vmatpush1.msra.mxu0 %v162
    %171 = vmatprep.subr.mxu0 0.0
    %172 = vmatpush1.msra.mxu0 %v163
    %173 = vmatprep.subr.mxu0 0.0
    %174 = vmatpush1.msra.mxu0 %v164
    %175 = vmatprep.subr.mxu0 0.0
    %176 = vmatpush1.msra.mxu0 %v165
    %177 = vmatprep.subr.mxu0 0.0
    %178 = vmatpush1.msra.mxu0 0.0
    %179 = vmatprep.subr.mxu0 0.0
    %180 = vmatpush1.msra.mxu0 0.0
    %181 = vmatprep.subr.mxu0 0.0
    %182 = vmatpush1.msra.mxu0 0.0
    %183 = vmatprep.subr.mxu0 0.0
    %184 = vmatpush1.msra.mxu0 0.0
    %185 = vmatprep.subr.mxu0 0.0
    %186 = vmatpush1.msra.mxu0 0.0
    %187 = vmatprep.subr.mxu0 0.0
    %188 = vmatpush1.msra.mxu0 0.0
    %189 = vmatprep.subr.mxu0 0.0
    %190 = vmatpush1.msra.mxu0 0.0
    %191 = vmatprep.subr.mxu0 0.0
    %192 = vmatpush1.msra.mxu0 0.0
    %193 = vmatprep.subr.mxu0 0.0
    %194 = vmatpush1.msra.mxu0 0.0
    %195 = vmatprep.subr.mxu0 0.0
    %196 = vmatpush1.msra.mxu0 0.0
    %197 = vmatprep.subr.mxu0 0.0
    %198 = vmatpush1.msra.mxu0 0.0
    %199 = vmatprep.subr.mxu0 0.0
    %200 = vmatpush1.msra.mxu0 0.0
    %201 = vmatprep.subr.mxu0 0.0
    %202 = vmatpush1.msra.mxu0 0.0
    %203 = vmatprep.subr.mxu0 0.0
    %204 = vmatpush1.msra.mxu0 0.0
    %205 = vmatprep.subr.mxu0 0.0
    %206 = vmatpush1.msra.mxu0 0.0
    %207 = vmatprep.subr.mxu0 0.0
    %208 = vmatpush1.msra.mxu0 0.0
    %209 = vmatprep.subr.mxu0 0.0
    %210 = vmatpush1.msra.mxu0 0.0
    %211 = vmatprep.subr.mxu0 0.0
    %212 = vmatpush1.msra.mxu0 0.0
    %213 = vmatprep.subr.mxu0 0.0
    %214 = vmatpush1.msra.mxu0 0.0
    %215 = vmatprep.subr.mxu0 0.0
    %216 = vmatpush1.msra.mxu0 0.0
    %217 = vmatprep.subr.mxu0 0.0
    %218 = vmatpush1.msra.mxu0 0.0
    %219 = vmatprep.subr.mxu0 0.0
    %220 = vmatpush1.msra.mxu0 0.0
    %221 = vmatprep.subr.mxu0 0.0
    %222 = vmatpush1.msra.mxu0 0.0
    %223 = vmatprep.subr.mxu0 0.0
    %224 = vmatpush1.msra.mxu0 0.0
    %225 = vmatprep.subr.mxu0 0.0
    %226 = vmatpush1.msra.mxu0 0.0
    %227 = vmatprep.subr.mxu0 0.0
    %228 = vmatpush1.msra.mxu0 0.0
    %229 = vmatprep.subr.mxu0 0.0
    %230 = vmatpush1.msra.mxu0 0.0
    %231 = vmatprep.subr.mxu0 0.0
    %232 = vmatpush1.msra.mxu0 0.0
    %233 = vmatprep.mubr.f32.mxu0 0.0
    %234 = vmatmul.mubr.f32.gmra.mrb[0].mxu0 %v167
    %v235 = vpop.f32.mrb[0].mxu0
    %v236 = vadd.f32 0.0, %v235
    %v237 = vpop.f32.mrb[0].mxu0
    %238 = vdwg.mxu0
    %v239 = vmul.f32 %v236, 0.0078125
    %v240 = vmul.f32 %v239, %v239
    %v242 = vrot.slane %v240, 7
    %v244 = vsub.f32 %v239, %v242
    %v245 = vmax.f32 %v244, 0.0
    %v246 = vadd.f32 %v245, 1e-05
    %v247 = vrsqrt.pop %v246
    %v249 = vrot.slane %v247, 1
    %v251 = vmul.f32 %v46, %v249
    %v252 = vlaneseq
    %v253 = vshrl.u32 %v252, 7
    %v254 = vsub.s32 0, %v253
    %v255 = vrot.slane %v239, %v254
    %v256 = vsub.f32 %v131, %v255
    %v257 = vsub.f32 %v136, %v255
    %v258 = vlaneseq
    %v259 = vshrl.u32 %v258, 7
    %v260 = vsub.s32 0, %v259
    %v261 = vrot.slane %v251, %v260
    %v262 = vmul.f32 %v256, %v261
    %v263 = vmul.f32 %v257, %v261
    %v264 = vlaneseq
    %v265 = vshrl.u32 %v264, 7
    %v266 = vsub.s32 1, %v265
    %v267 = vrot.slane %v46, %v266
    %v268 = vadd.f32 %v262, %v267
    %v269 = vadd.f32 %v263, %v267
    %v270 = vmax.f32 %v268, 0.0
    %v271 = vmax.f32 %v269, 0.0
    %v272 = vlaneseq
    %v273 = vshrl.u32 %v272, 7
    %v274 = vadd.s32 %v273, 8
    %vm275 = vcmp.lt.s32.totalorder %v273, 0
    %v276 = vsub.s32 0, %v273
    %v277 = vsel %vm275, %v276, %v273
    %v278 = vshrl.u32 %v277, 3
    %v279 = vand.u32 %v277, 7
    %v280 = vsub.s32 0, %v279
    %v281 = vsel %vm275, %v280, %v279
    %vm282 = vcmp.lt.s32.totalorder %v274, 0
    %v283 = vsub.s32 0, %v274
    %v284 = vsel %vm282, %v283, %v274
    %v285 = vshrl.u32 %v284, 3
    %v286 = vand.u32 %v284, 7
    %v287 = vsub.s32 0, %v286
    %v288 = vsel %vm282, %v287, %v286
    %vm289 = vcmp.ne.s32.totalorder %v281, 0
    %vm290 = vcmp.ne.s32.totalorder %v288, 0
    %vm291 = vcmp.lt.s32.totalorder %v281, 0
    %vm292 = vcmp.lt.s32.totalorder %v288, 0
    %vm293 = vmand %vm291, %vm289
    %vm294 = vmand %vm292, %vm290
    %v295 = vadd.s32 %v281, 8
    %v296 = vadd.s32 %v288, 8
    %v297 = vsel %vm293, %v295, %v281
    %v298 = vsel %vm294, %v296, %v288
    %vm299 = vcmp.ne.s32.totalorder %v297, 0
    %vm300 = vcmp.ne.s32.totalorder %v298, 0
    %v301 = vrot.slane %v270, 7
    %v302 = vrot.slane %v271, 7
    %vm303 = vcmp.lt.s32.totalorder %v273, 1
    %v304 = vsel %vm303, %v301, %v302
    %v305 = vsel %vm303, %v302, %v301
    %v306 = vsel %vm299, %v305, 0.0
    %v307 = vsel %vm300, %v304, 0.0
    %vm308 = vcmp.ne.s32.totalorder %v297, 7
    %vm309 = vcmp.ne.s32.totalorder %v298, 7
    %v310 = vrot.slane %v270, 1
    %v311 = vrot.slane %v271, 1
    %vm312 = vcmp.lt.s32.totalorder %v273, 7
    %v313 = vsel %vm312, %v310, %v311
    %v314 = vsel %vm312, %v311, %v310
    %v315 = vsel %vm308, %v313, 0.0
    %v316 = vsel %vm309, %v314, 0.0
    %319 = vrot.lane.b32.xlu0 %v270, 32
    %v320 = vpop.permute.xlu0 %319
    %321 = vrot.lane.b32.xlu0 %v271, 32
    %v322 = vpop.permute.xlu0 %321
    %327 = vrot.lane.b32.xlu0 %v315, 64
    %v328 = vpop.permute.xlu0 %327
    %329 = vrot.lane.b32.xlu0 %v316, 64
    %v330 = vpop.permute.xlu0 %329
    %v333 = vsel %vm139, %v306, %v320
    %v334 = vsel %vm139, %v307, %v322
    %vm335 = vcmask 523264
    %v336 = vsel %vm335, %v333, %v328
    %v337 = vsel %vm335, %v334, %v330
    %v338 = vld [vmem:[%s2] sm:$0xff]
    %v339 = vld [vmem:[%s2 + $0x8] sm:$0xff]
    %v340 = vld [vmem:[%s2 + $0x10] sm:$0xff]
    %v341 = vld [vmem:[%s2 + $0x18] sm:$0xff]
    %v342 = vld [vmem:[%s2 + $0x20] sm:$0xff]
    %v343 = vld [vmem:[%s2 + $0x28] sm:$0xff]
    %v344 = vld [vmem:[%s2 + $0x30] sm:$0xff]
    %v345 = vld [vmem:[%s2 + $0x38] sm:$0xff]
    %v346 = vld [vmem:[%s2 + $0x40] sm:$0xff]
    %v347 = vld [vmem:[%s2 + $0x48] sm:$0xff]
    %v348 = vld [vmem:[%s2 + $0x50] sm:$0xff]
    %v349 = vld [vmem:[%s2 + $0x58] sm:$0xff]
    %vm350 = vcmask 785408
    %v352 = vsel %vm350, %v336, 0
    %v355 = vsel %vm350, %v337, 0
    %357 = vmatprep.subr.mxu0 0.0
    %358 = vmatpush1.msra.mxu0 %v338
    %359 = vmatprep.subr.mxu0 0.0
    %360 = vmatpush1.msra.mxu0 %v339
    %361 = vmatprep.subr.mxu0 0.0
    %362 = vmatpush1.msra.mxu0 %v340
    %363 = vmatprep.subr.mxu0 0.0
    %364 = vmatpush1.msra.mxu0 %v341
    %365 = vmatprep.subr.mxu0 0.0
    %366 = vmatpush1.msra.mxu0 %v342
    %367 = vmatprep.subr.mxu0 0.0
    %368 = vmatpush1.msra.mxu0 %v343
    %369 = vmatprep.subr.mxu0 0.0
    %370 = vmatpush1.msra.mxu0 %v344
    %371 = vmatprep.subr.mxu0 0.0
    %372 = vmatpush1.msra.mxu0 %v345
    %373 = vmatprep.subr.mxu0 0.0
    %374 = vmatpush1.msra.mxu0 %v346
    %375 = vmatprep.subr.mxu0 0.0
    %376 = vmatpush1.msra.mxu0 %v347
    %377 = vmatprep.subr.mxu0 0.0
    %378 = vmatpush1.msra.mxu0 %v348
    %379 = vmatprep.subr.mxu0 0.0
    %380 = vmatpush1.msra.mxu0 %v349
    %381 = vmatprep.subr.mxu0 0.0
    %382 = vmatpush1.msra.mxu0 0.0
    %383 = vmatprep.subr.mxu0 0.0
    %384 = vmatpush1.msra.mxu0 0.0
    %385 = vmatprep.subr.mxu0 0.0
    %386 = vmatpush1.msra.mxu0 0.0
    %387 = vmatprep.subr.mxu0 0.0
    %388 = vmatpush1.msra.mxu0 0.0
    %389 = vmatprep.subr.mxu0 0.0
    %390 = vmatpush1.msra.mxu0 0.0
    %391 = vmatprep.subr.mxu0 0.0
    %392 = vmatpush1.msra.mxu0 0.0
    %393 = vmatprep.subr.mxu0 0.0
    %394 = vmatpush1.msra.mxu0 0.0
    %395 = vmatprep.subr.mxu0 0.0
    %396 = vmatpush1.msra.mxu0 0.0
    %397 = vmatprep.subr.mxu0 0.0
    %398 = vmatpush1.msra.mxu0 0.0
    %399 = vmatprep.subr.mxu0 0.0
    %400 = vmatpush1.msra.mxu0 0.0
    %401 = vmatprep.subr.mxu0 0.0
    %402 = vmatpush1.msra.mxu0 0.0
    %403 = vmatprep.subr.mxu0 0.0
    %404 = vmatpush1.msra.mxu0 0.0
    %405 = vmatprep.subr.mxu0 0.0
    %406 = vmatpush1.msra.mxu0 0.0
    %407 = vmatprep.subr.mxu0 0.0
    %408 = vmatpush1.msra.mxu0 0.0
    %409 = vmatprep.subr.mxu0 0.0
    %410 = vmatpush1.msra.mxu0 0.0
    %411 = vmatprep.subr.mxu0 0.0
    %412 = vmatpush1.msra.mxu0 0.0
    %413 = vmatprep.subr.mxu0 0.0
    %414 = vmatpush1.msra.mxu0 0.0
    %415 = vmatprep.subr.mxu0 0.0
    %416 = vmatpush1.msra.mxu0 0.0
    %417 = vmatprep.subr.mxu0 0.0
    %418 = vmatpush1.msra.mxu0 0.0
    %419 = vmatprep.subr.mxu0 0.0
    %420 = vmatpush1.msra.mxu0 0.0
    %421 = vmatprep.mubr.f32.mxu0 0.0
    %422 = vmatmul.mubr.f32.gmra.mrb[0].mxu0 %v352
    %v423 = vpop.f32.mrb[0].mxu0
    %v424 = vadd.f32 0.0, %v423
    %v425 = vpop.f32.mrb[0].mxu0
    %426 = vmatprep.mubr.f32.mxu0 0.0
    %427 = vmatmul.mubr.f32.gmra.mrb[0].mxu0 %v355
    %v428 = vpop.f32.mrb[0].mxu0
    %v429 = vadd.f32 0.0, %v428
    %v430 = vpop.f32.mrb[0].mxu0
    %431 = vdwg.mxu0
    %v432 = vsel %vm139, %v424, 0.0
    %v433 = vsel %vm139, %v429, 0.0
    %v434 = vadd.f32 %v432, %v433
    %v435 = vrot.slane %v434, 4
    %v436 = vadd.f32 %v434, %v435
    %v437 = vrot.slane %v436, 2
    %v438 = vadd.f32 %v436, %v437
    %v439 = vrot.slane %v438, 1
    %v440 = vadd.f32 %v438, %v439
    %v441 = vmul.f32 %v424, %v424
    %v442 = vmul.f32 %v429, %v429
    %v443 = vsel %vm139, %v441, 0.0
    %v444 = vsel %vm139, %v442, 0.0
    %v445 = vadd.f32 %v443, %v444
    %v446 = vrot.slane %v445, 4
    %v447 = vadd.f32 %v445, %v446
    %v448 = vrot.slane %v447, 2
    %v449 = vadd.f32 %v447, %v448
    %v450 = vrot.slane %v449, 1
    %v451 = vadd.f32 %v449, %v450
    %v452 = vsel %vm160, %v440, %v451
    %v454 = vsel %vm139, %v452, 0
    %456 = vmatprep.subr.mxu0 0.0
    %457 = vmatpush1.msra.mxu0 %v162
    %458 = vmatprep.subr.mxu0 0.0
    %459 = vmatpush1.msra.mxu0 %v163
    %460 = vmatprep.subr.mxu0 0.0
    %461 = vmatpush1.msra.mxu0 %v164
    %462 = vmatprep.subr.mxu0 0.0
    %463 = vmatpush1.msra.mxu0 %v165
    %464 = vmatprep.subr.mxu0 0.0
    %465 = vmatpush1.msra.mxu0 0.0
    %466 = vmatprep.subr.mxu0 0.0
    %467 = vmatpush1.msra.mxu0 0.0
    %468 = vmatprep.subr.mxu0 0.0
    %469 = vmatpush1.msra.mxu0 0.0
    %470 = vmatprep.subr.mxu0 0.0
    %471 = vmatpush1.msra.mxu0 0.0
    %472 = vmatprep.subr.mxu0 0.0
    %473 = vmatpush1.msra.mxu0 0.0
    %474 = vmatprep.subr.mxu0 0.0
    %475 = vmatpush1.msra.mxu0 0.0
    %476 = vmatprep.subr.mxu0 0.0
    %477 = vmatpush1.msra.mxu0 0.0
    %478 = vmatprep.subr.mxu0 0.0
    %479 = vmatpush1.msra.mxu0 0.0
    %480 = vmatprep.subr.mxu0 0.0
    %481 = vmatpush1.msra.mxu0 0.0
    %482 = vmatprep.subr.mxu0 0.0
    %483 = vmatpush1.msra.mxu0 0.0
    %484 = vmatprep.subr.mxu0 0.0
    %485 = vmatpush1.msra.mxu0 0.0
    %486 = vmatprep.subr.mxu0 0.0
    %487 = vmatpush1.msra.mxu0 0.0
    %488 = vmatprep.subr.mxu0 0.0
    %489 = vmatpush1.msra.mxu0 0.0
    %490 = vmatprep.subr.mxu0 0.0
    %491 = vmatpush1.msra.mxu0 0.0
    %492 = vmatprep.subr.mxu0 0.0
    %493 = vmatpush1.msra.mxu0 0.0
    %494 = vmatprep.subr.mxu0 0.0
    %495 = vmatpush1.msra.mxu0 0.0
    %496 = vmatprep.subr.mxu0 0.0
    %497 = vmatpush1.msra.mxu0 0.0
    %498 = vmatprep.subr.mxu0 0.0
    %499 = vmatpush1.msra.mxu0 0.0
    %500 = vmatprep.subr.mxu0 0.0
    %501 = vmatpush1.msra.mxu0 0.0
    %502 = vmatprep.subr.mxu0 0.0
    %503 = vmatpush1.msra.mxu0 0.0
    %504 = vmatprep.subr.mxu0 0.0
    %505 = vmatpush1.msra.mxu0 0.0
    %506 = vmatprep.subr.mxu0 0.0
    %507 = vmatpush1.msra.mxu0 0.0
    %508 = vmatprep.subr.mxu0 0.0
    %509 = vmatpush1.msra.mxu0 0.0
    %510 = vmatprep.subr.mxu0 0.0
    %511 = vmatpush1.msra.mxu0 0.0
    %512 = vmatprep.subr.mxu0 0.0
    %513 = vmatpush1.msra.mxu0 0.0
    %514 = vmatprep.subr.mxu0 0.0
    %515 = vmatpush1.msra.mxu0 0.0
    %516 = vmatprep.subr.mxu0 0.0
    %517 = vmatpush1.msra.mxu0 0.0
    %518 = vmatprep.subr.mxu0 0.0
    %519 = vmatpush1.msra.mxu0 0.0
    %520 = vmatprep.mubr.f32.mxu0 0.0
    %521 = vmatmul.mubr.f32.gmra.mrb[0].mxu0 %v454
    %v522 = vpop.f32.mrb[0].mxu0
    %v523 = vadd.f32 0.0, %v522
    %v524 = vpop.f32.mrb[0].mxu0
    %525 = vdwg.mxu0
    %v526 = vmul.f32 %v523, 0.0078125
    %v527 = vmul.f32 %v526, %v526
    %v529 = vrot.slane %v527, 7
    %v531 = vsub.f32 %v526, %v529
    %v532 = vmax.f32 %v531, 0.0
    %v533 = vadd.f32 %v532, 1e-05
    %v534 = vrsqrt.pop %v533
    %v536 = vrot.slane %v534, 7
    %v538 = vmul.f32 %v46, %v536
    %v539 = vlaneseq
    %v540 = vshrl.u32 %v539, 7
    %v541 = vsub.s32 0, %v540
    %v542 = vrot.slane %v526, %v541
    %v543 = vsub.f32 %v424, %v542
    %v544 = vsub.f32 %v429, %v542
    %v545 = vlaneseq
    %v546 = vshrl.u32 %v545, 7
    %v547 = vsub.s32 2, %v546
    %v548 = vrot.slane %v538, %v547
    %v549 = vmul.f32 %v543, %v548
    %v550 = vmul.f32 %v544, %v548
    %v551 = vlaneseq
    %v552 = vshrl.u32 %v551, 7
    %v553 = vsub.s32 3, %v552
    %v554 = vrot.slane %v46, %v553
    %v555 = vadd.f32 %v549, %v554
    %v556 = vadd.f32 %v550, %v554
    %v557 = vmax.f32 %v555, 0.0
    %v558 = vmax.f32 %v556, 0.0
    %v559 = vld [vmem:[%s3] sm:$0xff]
    %v560 = vld [vmem:[%s3 + $0x8] sm:$0xff]
    %v561 = vld [vmem:[%s3 + $0x10] sm:$0xff]
    %v562 = vld [vmem:[%s3 + $0x18] sm:$0xff]
    %v564 = vsel %vm139, %v557, 0
    %v567 = vsel %vm139, %v558, 0
    %569 = vmatprep.subr.mxu0 0.0
    %570 = vmatpush1.msra.mxu0 %v559
    %571 = vmatprep.subr.mxu0 0.0
    %572 = vmatpush1.msra.mxu0 %v560
    %573 = vmatprep.subr.mxu0 0.0
    %574 = vmatpush1.msra.mxu0 %v561
    %575 = vmatprep.subr.mxu0 0.0
    %576 = vmatpush1.msra.mxu0 %v562
    %577 = vmatprep.subr.mxu0 0.0
    %578 = vmatpush1.msra.mxu0 0.0
    %579 = vmatprep.subr.mxu0 0.0
    %580 = vmatpush1.msra.mxu0 0.0
    %581 = vmatprep.subr.mxu0 0.0
    %582 = vmatpush1.msra.mxu0 0.0
    %583 = vmatprep.subr.mxu0 0.0
    %584 = vmatpush1.msra.mxu0 0.0
    %585 = vmatprep.subr.mxu0 0.0
    %586 = vmatpush1.msra.mxu0 0.0
    %587 = vmatprep.subr.mxu0 0.0
    %588 = vmatpush1.msra.mxu0 0.0
    %589 = vmatprep.subr.mxu0 0.0
    %590 = vmatpush1.msra.mxu0 0.0
    %591 = vmatprep.subr.mxu0 0.0
    %592 = vmatpush1.msra.mxu0 0.0
    %593 = vmatprep.subr.mxu0 0.0
    %594 = vmatpush1.msra.mxu0 0.0
    %595 = vmatprep.subr.mxu0 0.0
    %596 = vmatpush1.msra.mxu0 0.0
    %597 = vmatprep.subr.mxu0 0.0
    %598 = vmatpush1.msra.mxu0 0.0
    %599 = vmatprep.subr.mxu0 0.0
    %600 = vmatpush1.msra.mxu0 0.0
    %601 = vmatprep.subr.mxu0 0.0
    %602 = vmatpush1.msra.mxu0 0.0
    %603 = vmatprep.subr.mxu0 0.0
    %604 = vmatpush1.msra.mxu0 0.0
    %605 = vmatprep.subr.mxu0 0.0
    %606 = vmatpush1.msra.mxu0 0.0
    %607 = vmatprep.subr.mxu0 0.0
    %608 = vmatpush1.msra.mxu0 0.0
    %609 = vmatprep.subr.mxu0 0.0
    %610 = vmatpush1.msra.mxu0 0.0
    %611 = vmatprep.subr.mxu0 0.0
    %612 = vmatpush1.msra.mxu0 0.0
    %613 = vmatprep.subr.mxu0 0.0
    %614 = vmatpush1.msra.mxu0 0.0
    %615 = vmatprep.subr.mxu0 0.0
    %616 = vmatpush1.msra.mxu0 0.0
    %617 = vmatprep.subr.mxu0 0.0
    %618 = vmatpush1.msra.mxu0 0.0
    %619 = vmatprep.subr.mxu0 0.0
    %620 = vmatpush1.msra.mxu0 0.0
    %621 = vmatprep.subr.mxu0 0.0
    %622 = vmatpush1.msra.mxu0 0.0
    %623 = vmatprep.subr.mxu0 0.0
    %624 = vmatpush1.msra.mxu0 0.0
    %625 = vmatprep.subr.mxu0 0.0
    %626 = vmatpush1.msra.mxu0 0.0
    %627 = vmatprep.subr.mxu0 0.0
    %628 = vmatpush1.msra.mxu0 0.0
    %629 = vmatprep.subr.mxu0 0.0
    %630 = vmatpush1.msra.mxu0 0.0
    %631 = vmatprep.subr.mxu0 0.0
    %632 = vmatpush1.msra.mxu0 0.0
    %633 = vmatprep.mubr.f32.mxu0 0.0
    %634 = vmatmul.mubr.f32.gmra.mrb[0].mxu0 %v564
    %v635 = vpop.f32.mrb[0].mxu0
    %v636 = vadd.f32 0.0, %v635
    %v637 = vpop.f32.mrb[0].mxu0
    %638 = vmatprep.mubr.f32.mxu0 0.0
    %639 = vmatmul.mubr.f32.gmra.mrb[0].mxu0 %v567
    %v640 = vpop.f32.mrb[0].mxu0
    %v641 = vadd.f32 0.0, %v640
    %v642 = vpop.f32.mrb[0].mxu0
    %643 = vdwg.mxu0
    %v644 = vadd.f32 %v636, %v641
    %v645 = vrot.slane %v644, 4
    %v646 = vadd.f32 %v644, %v645
    %v647 = vrot.slane %v646, 2
    %v648 = vadd.f32 %v646, %v647
    %v649 = vrot.slane %v648, 1
    %v650 = vadd.f32 %v648, %v649
    %v651 = vmul.f32 %v636, %v636
    %v652 = vmul.f32 %v641, %v641
    %v653 = vadd.f32 %v651, %v652
    %v654 = vrot.slane %v653, 4
    %v655 = vadd.f32 %v653, %v654
    %v656 = vrot.slane %v655, 2
    %v657 = vadd.f32 %v655, %v656
    %v658 = vrot.slane %v657, 1
    %v659 = vadd.f32 %v657, %v658
    %v660 = vsel %vm160, %v650, %v659
    %v661 = vld [vmem:[%s5] sm:$0xff]
    %v662 = vld [vmem:[%s5 + $0x8] sm:$0xff]
    %v663 = vld [vmem:[%s5 + $0x10] sm:$0xff]
    %v664 = vld [vmem:[%s5 + $0x18] sm:$0xff]
    %v665 = vld [vmem:[%s5 + $0x20] sm:$0xff]
    %v666 = vld [vmem:[%s5 + $0x28] sm:$0xff]
    %v667 = vld [vmem:[%s5 + $0x30] sm:$0xff]
    %v668 = vld [vmem:[%s5 + $0x38] sm:$0xff]
    %v669 = vld [vmem:[%s5 + $0x40] sm:$0xff]
    %v670 = vld [vmem:[%s5 + $0x48] sm:$0xff]
    %v671 = vld [vmem:[%s5 + $0x50] sm:$0xff]
    %v672 = vld [vmem:[%s5 + $0x58] sm:$0xff]
    %v673 = vld [vmem:[%s5 + $0x60] sm:$0xff]
    %v674 = vld [vmem:[%s5 + $0x68] sm:$0xff]
    %v675 = vld [vmem:[%s5 + $0x70] sm:$0xff]
    %v676 = vld [vmem:[%s5 + $0x78] sm:$0xff]
    %677 = vmatprep.subr.mxu0 0.0
    %678 = vmatpush1.msra.mxu0 %v661
    %679 = vmatprep.subr.mxu0 0.0
    %680 = vmatpush1.msra.mxu0 %v662
    %681 = vmatprep.subr.mxu0 0.0
    %682 = vmatpush1.msra.mxu0 %v663
    %683 = vmatprep.subr.mxu0 0.0
    %684 = vmatpush1.msra.mxu0 %v664
    %685 = vmatprep.subr.mxu0 0.0
    %686 = vmatpush1.msra.mxu0 %v665
    %687 = vmatprep.subr.mxu0 0.0
    %688 = vmatpush1.msra.mxu0 %v666
    %689 = vmatprep.subr.mxu0 0.0
    %690 = vmatpush1.msra.mxu0 %v667
    %691 = vmatprep.subr.mxu0 0.0
    %692 = vmatpush1.msra.mxu0 %v668
    %693 = vmatprep.subr.mxu0 0.0
    %694 = vmatpush1.msra.mxu0 %v669
    %695 = vmatprep.subr.mxu0 0.0
    %696 = vmatpush1.msra.mxu0 %v670
    %697 = vmatprep.subr.mxu0 0.0
    %698 = vmatpush1.msra.mxu0 %v671
    %699 = vmatprep.subr.mxu0 0.0
    %700 = vmatpush1.msra.mxu0 %v672
    %701 = vmatprep.subr.mxu0 0.0
    %702 = vmatpush1.msra.mxu0 %v673
    %703 = vmatprep.subr.mxu0 0.0
    %704 = vmatpush1.msra.mxu0 %v674
    %705 = vmatprep.subr.mxu0 0.0
    %706 = vmatpush1.msra.mxu0 %v675
    %707 = vmatprep.subr.mxu0 0.0
    %708 = vmatpush1.msra.mxu0 %v676
    %709 = vmatprep.subr.mxu0 0.0
    %710 = vmatpush1.msra.mxu0 0.0
    %711 = vmatprep.subr.mxu0 0.0
    %712 = vmatpush1.msra.mxu0 0.0
    %713 = vmatprep.subr.mxu0 0.0
    %714 = vmatpush1.msra.mxu0 0.0
    %715 = vmatprep.subr.mxu0 0.0
    %716 = vmatpush1.msra.mxu0 0.0
    %717 = vmatprep.subr.mxu0 0.0
    %718 = vmatpush1.msra.mxu0 0.0
    %719 = vmatprep.subr.mxu0 0.0
    %720 = vmatpush1.msra.mxu0 0.0
    %721 = vmatprep.subr.mxu0 0.0
    %722 = vmatpush1.msra.mxu0 0.0
    %723 = vmatprep.subr.mxu0 0.0
    %724 = vmatpush1.msra.mxu0 0.0
    %725 = vmatprep.subr.mxu0 0.0
    %726 = vmatpush1.msra.mxu0 0.0
    %727 = vmatprep.subr.mxu0 0.0
    %728 = vmatpush1.msra.mxu0 0.0
    %729 = vmatprep.subr.mxu0 0.0
    %730 = vmatpush1.msra.mxu0 0.0
    %731 = vmatprep.subr.mxu0 0.0
    %732 = vmatpush1.msra.mxu0 0.0
    %733 = vmatprep.subr.mxu0 0.0
    %734 = vmatpush1.msra.mxu0 0.0
    %735 = vmatprep.subr.mxu0 0.0
    %736 = vmatpush1.msra.mxu0 0.0
    %737 = vmatprep.subr.mxu0 0.0
    %738 = vmatpush1.msra.mxu0 0.0
    %739 = vmatprep.subr.mxu0 0.0
    %740 = vmatpush1.msra.mxu0 0.0
    %741 = vmatprep.mubr.f32.mxu0 0.0
    %742 = vmatmul.mubr.f32.gmra.mrb[0].mxu0 %v660
    %v743 = vpop.f32.mrb[0].mxu0
    %v744 = vadd.f32 0.0, %v743
    %v745 = vpop.f32.mrb[0].mxu0
    %746 = vdwg.mxu0
    %v747 = vmul.f32 %v744, 0.0078125
    %v748 = vmul.f32 %v747, %v747
    %v750 = vrot.slane %v748, 7
    %v752 = vsub.f32 %v747, %v750
    %v753 = vmax.f32 %v752, 0.0
    %v754 = vadd.f32 %v753, 1e-05
    %v755 = vrsqrt.pop %v754
    %v757 = vrot.slane %v755, 1
    %v759 = vmul.f32 %v47, %v757
    %v760 = vlaneseq
    %v761 = vshrl.u32 %v760, 7
    %v762 = vsub.s32 0, %v761
    %v763 = vrot.slane %v747, %v762
    %v764 = vsub.f32 %v636, %v763
    %v765 = vsub.f32 %v641, %v763
    %v766 = vlaneseq
    %v767 = vshrl.u32 %v766, 7
    %v768 = vsub.s32 0, %v767
    %v769 = vrot.slane %v759, %v768
    %v770 = vmul.f32 %v764, %v769
    %v771 = vmul.f32 %v765, %v769
    %v772 = vlaneseq
    %v773 = vshrl.u32 %v772, 7
    %v774 = vsub.s32 1, %v773
    %v775 = vrot.slane %v47, %v774
    %v776 = vadd.f32 %v770, %v775
    %v777 = vadd.f32 %v771, %v775
    %v778 = vadd.f32 %v776, %v44
    %v779 = vadd.f32 %v777, %v45
    %v780 = vmax.f32 %v778, 0.0
    %v781 = vmax.f32 %v779, 0.0
    %782 = vst [vmem:[#allocation5] sm:$0xff] %v780
    %783 = vst [vmem:[#allocation5 + $0x8] sm:$0xff] %v781
    // Predicated region
    $region38: #{tpu_custom_call.1} parent=1 // pred_check
      _
    $region39: #{tpu_custom_call.1} parent=1 // pred_check_branch
      %785 = sbr.rel (0) target = $region41
    $region40: #{tpu_custom_call.1} parent=1 // pred_region
      %s787 = ssub.s32 256, 256
      %788 = vsyncadd [#allocation4], %s787
      %s789 = sshll.u32 [#allocation5], 4
      %s790 = int_to_ptr.vmem [resolvable:$true] %s789
      %795 = dma.vmem_to_hbm [thread:$0]  %s790, 256, %s8, [#allocation4], 128, 128, 8
    $region41: #{tpu_custom_call.1} parent=1 // pred_fallthru
      _
    // Predicated region
    $region42: #{tpu_custom_call.1} parent=1 // pred_check
      _
    $region43: #{tpu_custom_call.1} parent=1 // pred_check_branch
      %797 = sbr.rel (0) target = $region45
    $region44: #{tpu_custom_call.1} parent=1 // pred_region
      %798 = dma.done [#allocation4], 256
    $region45: #{tpu_custom_call.1} parent=1 // pred_fallthru
      _
    %799 = vsyncpa [#allocation3], 1
    %800 = vsyncpa [#allocation4], 1

</llo_original>
